<compile_context>
chip_gen: v7x
topology: tpu7x:2x2x1
jax: 0.10.0
libtpu: 0.0.40
codegen_flags: <defaults>
</compile_context>

<pallas_src>
import jax
import jax.numpy as jnp
from jax.experimental import pallas as pl
from jax.experimental.pallas import tpu as pltpu


def _joints_kl_kernel(pred_ref, gt_ref, loss_ref):
    x = pred_ref[...].astype(jnp.float32)   # (TR, HW) raw heatmap predictions
    t = gt_ref[...].astype(jnp.float32)     # (TR, HW) raw heatmap labels

    # log_softmax over the spatial axis (numerically stable).
    m = jnp.max(x, axis=-1, keepdims=True)
    z = x - m
    lse = jnp.log(jnp.sum(jnp.exp(z), axis=-1, keepdims=True))
    log_p = z - lse                                            # (TR, HW)

    # KL with the target normalization hoisted out of the elementwise math:
    #   gt = t / t_sum
    #   sum(gt * (log gt - log_p)) = sum(t * (log t - log_p)) / t_sum - log(t_sum)
    # Only one select per element (guarding log(0)); t*(...) is exactly 0 where
    # t == 0 (xlogy semantics).  Rows whose target sums to 0 produce NaN/Inf,
    # matching PyTorch's KLDivLoss on a 0/0-normalized target.
    log_t = jnp.log(jnp.where(t > 0.0, t, 1.0))
    e = t * (log_t - log_p)                                    # (TR, HW)

    t_sum = jnp.sum(t, axis=-1, keepdims=True)                 # (TR, 1)
    e_sum = jnp.sum(e, axis=-1, keepdims=True)                 # (TR, 1)
    row = e_sum / t_sum - jnp.log(t_sum)                       # (TR, 1)

    # Lane-dense store: one (1, TR) lane-major row per grid step
    # (no masked vst on a last-dim-1 block).
    loss_ref[0, :] = row[:, 0]


def _round_up(x, m):
    return ((x + m - 1) // m) * m


def _tpu_tuning():
    """Per-generation VMEM budgets (bytes) and minimum grid steps."""
    kind = ""
    try:
        kind = (jax.devices()[0].device_kind or "").lower()
    except Exception:
        pass
    if "v7" in kind:
        # 64 MiB VMEM per TC, 2 TCs, 3.2 TB/s HBM: modest tiles, keep >=4 grid
        # steps so the "parallel" axis gives both TensorCores work.
        return dict(input_budget=8 << 20, total_budget=24 << 20,
                    vmem_limit=48 << 20, min_steps=4)
    if ("v6" in kind) or ("v5" in kind) or ("v4" in kind):
        # 128 MiB physical VMEM, 1 TC, HBM-bound: grow tiles to amortize the
        # ~0.35 us/step pipeline overhead.  All in-kernel math stays f32
        # (v5e VPU/EUP have no bf16 path).
        return dict(input_budget=20 << 20, total_budget=40 << 20,
                    vmem_limit=64 << 20, min_steps=1)
    # Unknown platform: conservative defaults that are safe everywhere.
    return dict(input_budget=8 << 20, total_budget=24 << 20,
                vmem_limit=48 << 20, min_steps=2)


def _pick_row_tile(hw, in_itemsize, n_rows, *, align, input_budget,
                   total_budget, min_steps):
    # True per-row VMEM footprint of one grid step:
    #   pipeline input buffers : 2 arrays x 2 buffers x hw x input itemsize
    #   in-kernel intermediates: ~5 live (TR, hw) f32 arrays
    per_row_inputs = 4 * hw * max(int(in_itemsize), 1)
    per_row_total = per_row_inputs + 5 * 4 * hw
    cap = min(input_budget // per_row_inputs, total_budget // per_row_total, 4096)
    cap = max(align, (cap // align) * align)
    # Don't pad tiny problems up to the cap; on multi-TC parts also keep at
    # least `min_steps` grid steps so both cores get work.
    needed = _round_up(n_rows, align)
    if min_steps > 1:
        needed = min(needed, max(align, _round_up(-(-n_rows // min_steps), align)))
    return max(align, min(cap, needed))


def joints_kl_loss(output, target, target_weight=None, reduction="mean"):
    """Pallas implementation of JointsKLLoss.forward.

    output, target: (B, K, H, W); target_weight: (B, K) or None.
    reduction: 'mean' -> scalar, 'none' -> (B,).
    """
    B, K, H, W = output.shape
    R, HW = B * K, H * W

    # Keep the original dtype across the pallas boundary (cast happens in-kernel;
    # bf16 heatmaps halve HBM traffic).
    pred = output.reshape(R, HW)
    gt = target.reshape(R, HW)

    # NO row padding: the row axis is tiled with a ragged last block; garbage
    # tail rows never reach the result (sliced away below).  Only pad the
    # spatial axis, and only when it is not lane-full -- mathematically exact
    # (pred pad -> softmax weight 0, target pad -> 0 contribution).
    if HW % 128 != 0:
        hw_pad = (-HW) % 128
        pred = jnp.pad(pred, ((0, 0), (0, hw_pad)), constant_values=-1e30)
        gt = jnp.pad(gt, ((0, 0), (0, hw_pad)), constant_values=0.0)
        HW += hw_pad

    in_itemsize = max(jnp.dtype(pred.dtype).itemsize, jnp.dtype(gt.dtype).itemsize)
    align = 16 if in_itemsize < 4 else 8          # bf16 sublane tile is 16
    tune = _tpu_tuning()
    TR = _pick_row_tile(HW, in_itemsize, R, align=align,
                        input_budget=tune["input_budget"],
                        total_budget=tune["total_budget"],
                        min_steps=tune["min_steps"])
    num_tiles = pl.cdiv(R, TR)

    per_row = pl.pallas_call(
        _joints_kl_kernel,
        out_shape=jax.ShapeDtypeStruct((num_tiles, TR), jnp.float32),
        grid=(num_tiles,),
        in_specs=[
            pl.BlockSpec((TR, HW), lambda i: (i, 0)),
            pl.BlockSpec((TR, HW), lambda i: (i, 0)),
        ],
        out_specs=pl.BlockSpec((1, TR), lambda i: (i, 0)),
        compiler_params=pltpu.CompilerParams(
            dimension_semantics=("parallel",),
            vmem_limit_bytes=tune["vmem_limit"],
        ),
        cost_estimate=pl.CostEstimate(
            flops=10 * R * HW,
            transcendentals=2 * R * HW,
            bytes_accessed=2 * R * HW * in_itemsize + 4 * num_tiles * TR,
        ),
    )(pred, gt)

    loss = per_row.reshape(-1)[:R].reshape(B, K)
    if target_weight is not None:
        loss = loss * target_weight.reshape(B, K).astype(jnp.float32)

    if reduction == "mean":
        return jnp.mean(loss)
    elif reduction == "none":
        return jnp.mean(loss, axis=-1)
    else:
        raise ValueError(f"unsupported reduction: {reduction}")


def _reference(output, target, target_weight=None, reduction="mean"):
    # pure-JAX reference mirroring the PyTorch module, for a sanity check
    B, K, H, W = output.shape
    x = output.astype(jnp.float32).reshape(B, K, -1)
    t = target.astype(jnp.float32).reshape(B, K, -1)
    log_p = jax.nn.log_softmax(x, axis=-1)
    gt = t / jnp.sum(t, axis=-1, keepdims=True)
    xlogy = jnp.where(gt > 0.0, gt * jnp.log(jnp.where(gt > 0.0, gt, 1.0)), 0.0)
    loss = jnp.sum(xlogy - gt * log_p, axis=-1)
    if target_weight is not None:
        loss = loss * target_weight.reshape(B, K)
    if reduction == "mean":
        return jnp.mean(loss)
    return jnp.mean(loss, axis=-1)


if __name__ == "__main__":
    key = jax.random.PRNGKey(0)
    k1, k2, k3 = jax.random.split(key, 3)

    RTOL, ATOL = 1e-4, 1e-4   # kernel uses the algebraically-hoisted form

    # ---- shape 1: B*K a multiple of 8 ----
    B, K, H, W = 2, 4, 16, 16
    output = jax.random.normal(k1, (B, K, H, W), dtype=jnp.float32)
    target = jax.random.uniform(k2, (B, K, H, W), dtype=jnp.float32) + 1e-3
    target_weight = jax.random.uniform(k3, (B, K), dtype=jnp.float32)

    out_mean = joints_kl_loss(output, target, target_weight, reduction="mean")
    out_none = joints_kl_loss(output, target, target_weight, reduction="none")
    jax.block_until_ready(out_mean)
    jax.block_until_ready(out_none)
    assert jnp.allclose(out_mean, _reference(output, target, target_weight, "mean"),
                        rtol=RTOL, atol=ATOL)
    assert jnp.allclose(out_none, _reference(output, target, target_weight, "none"),
                        rtol=RTOL, atol=ATOL)

    # target_weight=None path
    out_nw = joints_kl_loss(output, target, None, reduction="mean")
    jax.block_until_ready(out_nw)
    assert jnp.allclose(out_nw, _reference(output, target, None, "mean"),
                        rtol=RTOL, atol=ATOL)

    # bf16 inputs pass straight through the pallas boundary (cast in-kernel)
    out_bf16 = joints_kl_loss(output.astype(jnp.bfloat16),
                              target.astype(jnp.bfloat16),
                              target_weight, reduction="mean")
    jax.block_until_ready(out_bf16)
    ref_bf16 = _reference(output.astype(jnp.bfloat16),
                          target.astype(jnp.bfloat16),
                          target_weight, reduction="mean")
    assert jnp.allclose(out_bf16, ref_bf16, rtol=RTOL, atol=ATOL)

    # ---- shape 2: B*K not a multiple of the row tile (ragged last block, no pad) ----
    B2, K2 = 3, 5
    o2 = jax.random.normal(k1, (B2, K2, H, W), dtype=jnp.float32)
    t2 = jax.random.uniform(k2, (B2, K2, H, W), dtype=jnp.float32) + 1e-3
    w2 = jax.random.uniform(k3, (B2, K2), dtype=jnp.float32)
    out2 = joints_kl_loss(o2, t2, w2, reduction="none")
    jax.block_until_ready(out2)
    assert jnp.allclose(out2, _reference(o2, t2, w2, "none"), rtol=RTOL, atol=ATOL)

    print("KERNEL_OK")
</pallas_src>

<mosaic_0001>
module attributes {stable_mosaic.version = 11 : i64} {
  func.func @_joints_kl_kernel(%arg0: i32, %arg1: memref<8x256xf32, #tpu.memory_space<vmem>>, %arg2: memref<8x256xf32, #tpu.memory_space<vmem>>, %arg3: memref<1x8xf32, #tpu.memory_space<vmem>>) attributes {dimension_semantics = [#tpu.dimension_semantics<parallel>], iteration_bounds = array<i64: 1>, scalar_prefetch = 0 : i64, scratch_operands = 0 : i64, tpu.core_type = #tpu.core_type<tc>, window_params = [{transform_indices = @transform_0, window_bounds = array<i64: 8, 256>}, {transform_indices = @transform_1, window_bounds = array<i64: 8, 256>}, {transform_indices = @transform_2, window_bounds = array<i64: 1, 8>}]} {
    %c0 = arith.constant 0 : index
    %c0_0 = arith.constant 0 : index
    %0 = vector.load %arg1[%c0, %c0_0] : memref<8x256xf32, #tpu.memory_space<vmem>>, vector<8x256xf32>
    %c0_1 = arith.constant 0 : index
    %c0_2 = arith.constant 0 : index
    %1 = vector.load %arg2[%c0_1, %c0_2] : memref<8x256xf32, #tpu.memory_space<vmem>>, vector<8x256xf32>
    %cst = arith.constant dense<0xFF800000> : vector<8xf32>
    %2 = vector.multi_reduction <maximumf>, %0, %cst [1] : vector<8x256xf32> to vector<8xf32>
    %3 = vector.shape_cast %2 : vector<8xf32> to vector<8x1xf32>
    %4 = vector.broadcast %3 : vector<8x1xf32> to vector<8x256xf32>
    %5 = arith.subf %0, %4 : vector<8x256xf32>
    %6 = math.exp %5 : vector<8x256xf32>
    %cst_3 = arith.constant dense<0.000000e+00> : vector<8xf32>
    %7 = vector.multi_reduction <add>, %6, %cst_3 [1] : vector<8x256xf32> to vector<8xf32>
    %8 = vector.shape_cast %7 : vector<8xf32> to vector<8x1xf32>
    %9 = math.log %8 : vector<8x1xf32>
    %10 = vector.broadcast %9 : vector<8x1xf32> to vector<8x256xf32>
    %11 = arith.subf %5, %10 : vector<8x256xf32>
    %cst_4 = arith.constant 0.000000e+00 : f32
    %12 = vector.broadcast %cst_4 : f32 to vector<8x256xf32>
    %13 = arith.cmpf ogt, %1, %12 : vector<8x256xf32>
    %cst_5 = arith.constant 1.000000e+00 : f32
    %14 = vector.broadcast %cst_5 : f32 to vector<8x256xf32>
    %15 = arith.select %13, %1, %14 : vector<8x256xi1>, vector<8x256xf32>
    %16 = math.log %15 : vector<8x256xf32>
    %17 = arith.subf %16, %11 : vector<8x256xf32>
    %18 = arith.mulf %1, %17 : vector<8x256xf32>
    %cst_6 = arith.constant dense<0.000000e+00> : vector<8xf32>
    %19 = vector.multi_reduction <add>, %1, %cst_6 [1] : vector<8x256xf32> to vector<8xf32>
    %20 = vector.shape_cast %19 : vector<8xf32> to vector<8x1xf32>
    %cst_7 = arith.constant dense<0.000000e+00> : vector<8xf32>
    %21 = vector.multi_reduction <add>, %18, %cst_7 [1] : vector<8x256xf32> to vector<8xf32>
    %22 = vector.shape_cast %21 : vector<8xf32> to vector<8x1xf32>
    %23 = arith.divf %22, %20 : vector<8x1xf32>
    %24 = math.log %20 : vector<8x1xf32>
    %25 = arith.subf %23, %24 : vector<8x1xf32>
    %26 = vector.shape_cast %25 : vector<8x1xf32> to vector<8xf32>
    %c0_8 = arith.constant 0 : index
    %c0_9 = arith.constant 0 : index
    %27 = vector.load %arg3[%c0_8, %c0_9] : memref<1x8xf32, #tpu.memory_space<vmem>>, vector<1x8xf32>
    %28 = vector.shape_cast %27 : vector<1x8xf32> to vector<8xf32>
    %29 = vector.shape_cast %26 : vector<8xf32> to vector<1x8xf32>
    tpu.vector_store %arg3[%c0_8, %c0_9], %29 {strides = array<i32>} : memref<1x8xf32, #tpu.memory_space<vmem>>, vector<1x8xf32>,
    return
  }
  func.func @transform_0(%arg0: i32) -> (i32, i32) {
    %c0_i32 = arith.constant 0 : i32
    %c0_i32_0 = arith.constant 0 : i32
    return %arg0, %c0_i32 : i32, i32
  }
  func.func @transform_1(%arg0: i32) -> (i32, i32) {
    %c0_i32 = arith.constant 0 : i32
    %c0_i32_0 = arith.constant 0 : i32
    return %arg0, %c0_i32 : i32, i32
  }
  func.func @transform_2(%arg0: i32) -> (i32, i32) {
    %c0_i32 = arith.constant 0 : i32
    %c0_i32_0 = arith.constant 0 : i32
    return %arg0, %c0_i32 : i32, i32
  }
}

</mosaic_0001>

<llo_original>
// kernel: tpu_custom_call.1
$region0: #{tpu_custom_call.1}
  #allocation0 [shape = 'u32[]', space=smem, size = 0x4, offset = 0x4, fixed_abs, tag = 'smem constant byte address 0x4 - core index']
  #allocation1 [shape = 'u32[144,128]{1,0:T(1,128)}', space=vmem, size = 0x12000, scoped, tag = 'internal scratch']
  %s0 = inlined_call_operand.hbm [shape: f32[8,256], index: 0, kind: input, shape index: {}]
  %s1 = inlined_call_operand.hbm [shape: f32[8,256], index: 1, kind: input, shape index: {}]
  %s2 = inlined_call_operand.hbm [shape: f32[1,8], index: 2, kind: output, shape index: {}]
  %s3 = sld [smem:[#allocation0]]
  $region26: #{tpu_custom_call.1} parent=0
    _
  %s5 = ssub.s32 1, %s3
  %s6 = scalar_select 0, %s5, %s3
  $region1: #{tpu_custom_call.1} parent=0
    #allocation2 [shape = 'u8[8192]{0}', space=vmem, size = 0x2000, scoped, tag = 'input window, operand 0, single buffered']
    #allocation3 [shape = 's32[1]{0}', space=sflag, size = 0x4, scoped, tag = 'scoped memory for tpu_custom_call.1']
    #allocation4 [shape = 's32[1]{0}', space=sflag, size = 0x4, scoped, tag = 'scoped memory for tpu_custom_call.1']
    #allocation5 [shape = 'u8[8192]{0}', space=vmem, size = 0x2000, scoped, tag = 'input window, operand 1, single buffered']
    #allocation6 [shape = 's32[1]{0}', space=sflag, size = 0x4, scoped, tag = 'scoped memory for tpu_custom_call.1']
    #allocation7 [shape = 'u8[512]{0}', space=vmem, size = 0x400, scoped, tag = 'output window, operand 0, single buffered']
    %7 = vsyncpa [#allocation3], 0
    %8 = vsyncpa [#allocation6], 0
    %9 = vsyncpa [#allocation4], 0
    // Predicated region
    $region2: #{tpu_custom_call.1} parent=1 // pred_check
      _
    $region3: #{tpu_custom_call.1} parent=1 // pred_check_branch
      %11 = sbr.rel (0) target = $region5
    $region4: #{tpu_custom_call.1} parent=1 // pred_region
      %s13 = ssub.s32 256, 256
      %14 = vsyncadd [#allocation3], %s13
      %s16 = sshll.u32 [#allocation2], 4
      %s17 = int_to_ptr.vmem [resolvable:$true] %s16
      %19 = dma.hbm_to_vmem [thread:$0]  %s0, 256, %s17, [#allocation3]
    $region5: #{tpu_custom_call.1} parent=1 // pred_fallthru
      _
    // Predicated region
    $region6: #{tpu_custom_call.1} parent=1 // pred_check
      _
    $region7: #{tpu_custom_call.1} parent=1 // pred_check_branch
      %21 = sbr.rel (0) target = $region9
    $region8: #{tpu_custom_call.1} parent=1 // pred_region
      %s23 = ssub.s32 256, 256
      %24 = vsyncadd [#allocation6], %s23
      %s26 = sshll.u32 [#allocation5], 4
      %s27 = int_to_ptr.vmem [resolvable:$true] %s26
      %29 = dma.hbm_to_vmem [thread:$0]  %s1, 256, %s27, [#allocation6]
    $region9: #{tpu_custom_call.1} parent=1 // pred_fallthru
      _
    // Predicated region
    $region10: #{tpu_custom_call.1} parent=1 // pred_check
      _
    $region11: #{tpu_custom_call.1} parent=1 // pred_check_branch
      %31 = sbr.rel (0) target = $region13
    $region12: #{tpu_custom_call.1} parent=1 // pred_region
      %32 = dma.done [#allocation3], 256
    $region13: #{tpu_custom_call.1} parent=1 // pred_fallthru
      _
    // Predicated region
    $region14: #{tpu_custom_call.1} parent=1 // pred_check
      _
    $region15: #{tpu_custom_call.1} parent=1 // pred_check_branch
      %34 = sbr.rel (0) target = $region17
    $region16: #{tpu_custom_call.1} parent=1 // pred_region
      %35 = dma.done [#allocation6], 256
    $region17: #{tpu_custom_call.1} parent=1 // pred_fallthru
      _
    %v36 = vld [vmem:[#allocation2] sm:$0xff]
    %v37 = vld [vmem:[#allocation2 + $0x8] sm:$0xff]
    %v38 = vld [vmem:[#allocation5] sm:$0xff]
    %v39 = vld [vmem:[#allocation5 + $0x8] sm:$0xff]
    %v40 = vmax.f32 %v36, %v37
    %41 = vmax.xlane.f32.xlu0 %v40
    %v42 = vpop.xlane.xlu0 %41
    %v43 = vsub.f32 %v36, %v42
    %v44 = vsub.f32 %v37, %v42
    %v45 = vmul.f32 %v43, 1.442695
    %v46 = vpow.pop %v45
    %v47 = vmul.f32 %v44, 1.442695
    %v48 = vpow.pop %v47
    %v49 = vadd.f32 %v46, %v48
    %50 = vadd.xlane.f32.xlu0 %v49
    %v51 = vpop.xlane.xlu0 %50
    %v52 = vlog2.pop %v51
    %v53 = vmul.f32 %v52, 0.6931472
    %v54 = vsub.f32 %v43, %v53
    %v55 = vsub.f32 %v44, %v53
    %vm56 = vcmp.gt.f32.partialorder %v38, 0.0
    %vm57 = vcmp.gt.f32.partialorder %v39, 0.0
    %v58 = vsel %vm56, %v38, 1.0
    %v59 = vsel %vm57, %v39, 1.0
    %v60 = vlog2.pop %v58
    %v61 = vmul.f32 %v60, 0.6931472
    %v62 = vlog2.pop %v59
    %v63 = vmul.f32 %v62, 0.6931472
    %v64 = vsub.f32 %v61, %v54
    %v65 = vsub.f32 %v63, %v55
    %v66 = vmul.f32 %v38, %v64
    %v67 = vmul.f32 %v39, %v65
    %v68 = vadd.f32 %v38, %v39
    %69 = vadd.xlane.f32.xlu0 %v68
    %v70 = vpop.xlane.xlu0 %69
    %v71 = vadd.f32 %v66, %v67
    %72 = vadd.xlane.f32.xlu0 %v71
    %v73 = vpop.xlane.xlu0 %72
    %v74 = vrcp.pop %v70
    %v75 = vmul.f32 %v73, %v74
    %v76 = vlog2.pop %v70
    %v77 = vmul.f32 %v76, 0.6931472
    %v78 = vsub.f32 %v75, %v77
    %v80 = vlaneseq
    %v81 = vand.u32 %v80, 127
    %v82 = vlaneseq
    %v83 = vshrl.u32 %v82, 7
    %v84 = vsub.s32 %v81, %v83
    %v85 = vrot.slane %v78, %v84
    %vm87 = vcmask 57344
    %88 = vst.msk [vmem:[#allocation7] sm:$0x1] %vm87, %v85
    // Predicated region
    $region18: #{tpu_custom_call.1} parent=1 // pred_check
      _
    $region19: #{tpu_custom_call.1} parent=1 // pred_check_branch
      %90 = sbr.rel (0) target = $region21
    $region20: #{tpu_custom_call.1} parent=1 // pred_region
      %s92 = ssub.s32 16, 16
      %93 = vsyncadd [#allocation4], %s92
      %s95 = sshll.u32 [#allocation7], 4
      %s96 = int_to_ptr.vmem [resolvable:$true] %s95
      %98 = dma.vmem_to_hbm [thread:$0]  %s96, 16, %s2, [#allocation4]
    $region21: #{tpu_custom_call.1} parent=1 // pred_fallthru
      _
    // Predicated region
    $region22: #{tpu_custom_call.1} parent=1 // pred_check
      _
    $region23: #{tpu_custom_call.1} parent=1 // pred_check_branch
      %100 = sbr.rel (0) target = $region25
    $region24: #{tpu_custom_call.1} parent=1 // pred_region
      %101 = dma.done [#allocation4], 16
    $region25: #{tpu_custom_call.1} parent=1 // pred_fallthru
      _
    %102 = vsyncpa [#allocation3], 1
    %103 = vsyncpa [#allocation6], 1
    %104 = vsyncpa [#allocation4], 1

</llo_original>
